<compile_context>
chip_gen: v6e
topology: v6e:2x2x1
jax: 0.10.0
libtpu: 0.0.40
codegen_flags: <defaults>
</compile_context>

<pallas_src>
import functools

import numpy as np
import jax
import jax.numpy as jnp
from jax.experimental import pallas as pl
from jax.experimental.pallas import tpu as pltpu


# ----------------------------------------------------------------------------- kernel
def _darn_kernel(wb_ref, t_ref, x_ref, y_ref, out_ref, *, inv_n, c):
    """All-domain MiniDARN statistics in one invocation.

    wb_ref:  (2,)    SMEM -- [w, b] of the shared nn.Linear(1, 1)
    t_ref:   (1, Nt) VMEM -- target-domain inputs
    x_ref:   (S, N)  VMEM -- source-domain inputs, one domain per row
    y_ref:   (S, N)  VMEM -- source-domain regression targets
    out_ref: (S, 2)  VMEM -- [:, 0] = mean((Linear(x) - y)^2), [:, 1] = spectral radius
    inv_n:   Python float  -- 1 / N            (static, baked in)
    c:       Python float  -- Nt - N           (static, baked in)
    """
    S = x_ref.shape[0]

    w = wb_ref[0]
    b = wb_ref[1]

    # Target-domain gram statistics (Phi_t = [t, 1] => M_t = [[sum t^2, sum t],[sum t, Nt]]).
    t = t_ref[...]                       # (1, Nt)
    st = jnp.sum(t)                      # scalar
    stt = jnp.sum(t * t)                 # scalar

    x = x_ref[...]                       # (S, N)
    y = y_ref[...]                       # (S, N)

    # prediction = regress_net(x);  train_loss = mean((pred - y)^2)
    diff = x * w + b - y

    # Single fused cross-lane reduction for [sum diff^2, sum x, sum x^2].
    vals = jnp.concatenate([diff * diff, x, x * x], axis=0)        # (3S, N)
    sums = jnp.sum(vals, axis=-1, keepdims=True)                   # (3S, 1)
    sdd = sums[0:S]                                                # (S, 1)
    sx = sums[S:2 * S]                                             # (S, 1)
    sxx = sums[2 * S:3 * S]                                        # (S, 1)

    train_loss = sdd * inv_n                                       # (S, 1)

    # D = M_t - M_s = [[a, bb], [bb, c]] (real symmetric 2x2).
    a = stt - sxx
    bb = st - sx

    # torch.max(torch.norm(torch.eig(D)[0], dim=1)) == spectral radius == |m| + r
    m = 0.5 * (a + c)
    r = jnp.sqrt(0.25 * (a - c) * (a - c) + bb * bb)
    disc = jnp.abs(m) + r                                          # (S, 1)

    # One lane-concatenated store instead of two masked column stores.
    out_ref[...] = jnp.concatenate([train_loss, disc], axis=-1)    # (S, 2)


def darn_domain_stats(wb, t2d, xs, ys):
    """stats[S, 2] = [train_loss, disc] per source domain (single kernel call)."""
    S, N = xs.shape
    Nt = t2d.shape[-1]

    # Scaling guard: everything is fully resident (no grid, no pipelining).
    # Raise the scoped VMEM limit if the resident footprint grows; for larger N
    # switch to an N-tiled grid with an "arbitrary" reduction axis instead.
    # TODO(synk): add (S, TILE_N) grid tiling + f32 accumulators if N scales past VMEM.
    resident_bytes = 4 * (2 * S * N + Nt + S * 2) + (1 << 20)
    compiler_params = None
    if resident_bytes > (16 << 20):
        compiler_params = pltpu.CompilerParams(
            vmem_limit_bytes=min(resident_bytes * 2, 64 << 20)
        )

    kernel = functools.partial(
        _darn_kernel, inv_n=float(1.0 / N), c=float(Nt - N)
    )
    return pl.pallas_call(
        kernel,
        out_shape=jax.ShapeDtypeStruct((S, 2), jnp.float32),
        in_specs=[
            pl.BlockSpec(memory_space=pltpu.MemorySpace.SMEM),   # [w, b]
            pl.BlockSpec(memory_space=pltpu.MemorySpace.VMEM),   # t (1, Nt)
            pl.BlockSpec(memory_space=pltpu.MemorySpace.VMEM),   # xs (S, N)
            pl.BlockSpec(memory_space=pltpu.MemorySpace.VMEM),   # ys (S, N)
        ],
        out_specs=pl.BlockSpec(memory_space=pltpu.MemorySpace.VMEM),
        compiler_params=compiler_params,
    )(wb, t2d, xs, ys)


# ----------------------------------------------------------------------------- glue
def _l2_simplex_projection(d):
    """alpha = argmin_{alpha in simplex} <d, alpha> + ||alpha||_2.

    Closed form: alpha_i proportional to max(lam - d_i, 0) where lam solves
    sum_i max(lam - d_i, 0)^2 = 1.
    # TODO(synk): L2ProjFunction is not defined in the reference snippet; this is the
    # standard DARN L2 simplex projection its forward (dot(g, alpha) + ||alpha||) implies.
    """
    K = d.shape[0]
    ds = jnp.sort(d)
    csum = jnp.cumsum(ds)
    csum2 = jnp.cumsum(ds * ds)
    k = jnp.arange(1, K + 1, dtype=d.dtype)
    rad = csum * csum - k * (csum2 - 1.0)
    lam_k = (csum + jnp.sqrt(jnp.maximum(rad, 0.0))) / k
    next_d = jnp.concatenate([ds[1:], jnp.full((1,), jnp.inf, d.dtype)])
    valid = (rad >= 0.0) & (lam_k > ds) & (lam_k <= next_d)
    lam = lam_k[jnp.argmax(valid)]
    a = jnp.maximum(lam - d, 0.0)
    return a / jnp.sum(a)


@jax.jit
def _darn_forward(wb, xs, ys, t2d, gamma, mu):
    """End-to-end jitted MiniDARN forward: kernel -> projection -> loss."""
    stats = darn_domain_stats(wb, t2d, xs, ys)          # (S, 2)
    train_losses = stats[:, 0]
    discs = stats[:, 1]

    g = gamma * (train_losses + mu * discs)
    alpha = _l2_simplex_projection(g)
    loss = jnp.dot(g, alpha) + jnp.linalg.norm(alpha)
    return loss, alpha


class MiniDARNPallas:
    """JAX/Pallas port of MiniDARN.forward."""

    def __init__(self):
        # nn.Linear(1, 1): deterministic, in-script parameter init
        self.weight = np.float32(0.75)
        self.bias = np.float32(-0.10)
        self.gamma = 1.0
        self.mu = 0.01

    def forward(self, s_inputs, s_outputs, t_input):
        # s_inputs / s_outputs: lists of [N, 1] arrays (equal N); t_input: [Nt, 1].
        # Pre-stack on the HOST (numpy) -- no per-domain device-side reshape/stack ops.
        xs = np.stack(
            [np.asarray(jax.device_get(x), np.float32).reshape(-1) for x in s_inputs]
        )
        ys = np.stack(
            [np.asarray(jax.device_get(y), np.float32).reshape(-1) for y in s_outputs]
        )
        t2d = np.asarray(jax.device_get(t_input), np.float32).reshape(1, -1)
        wb = np.array([self.weight, self.bias], dtype=np.float32)

        loss, alpha = _darn_forward(wb, xs, ys, t2d, self.gamma, self.mu)
        return loss, np.asarray(jax.device_get(alpha))

    def inference(self, x):
        return jnp.asarray(x, jnp.float32) * self.weight + self.bias


# ----------------------------------------------------------------------------- main
def _reference_forward(s_inputs, s_outputs, t_input, w, b, gamma, mu):
    """Pure numpy mirror of the PyTorch forward (for a correctness check)."""
    t = np.asarray(jax.device_get(t_input), np.float64)
    Phi_t = np.concatenate([t, np.ones_like(t)], axis=1)
    M_t = Phi_t.T @ Phi_t
    tls, dcs = [], []
    for x, y in zip(s_inputs, s_outputs):
        x = np.asarray(jax.device_get(x), np.float64)
        y = np.asarray(jax.device_get(y), np.float64)
        pred = x * w + b
        tls.append(np.mean((pred - y) ** 2))
        Phi_s = np.concatenate([x, np.ones_like(x)], axis=1)
        M_s = Phi_s.T @ Phi_s
        ev = np.linalg.eigvals(M_t - M_s)  # torch.eig semantics: max eigenvalue modulus
        dcs.append(np.max(np.abs(ev)))
    tls = np.array(tls)
    dcs = np.array(dcs)
    g = gamma * (tls + mu * dcs)
    a = np.asarray(jax.device_get(_l2_simplex_projection(jnp.asarray(g, jnp.float32))))
    return g @ a + np.linalg.norm(a)


if __name__ == "__main__":
    key = jax.random.PRNGKey(0)
    S, N, Nt = 3, 128, 256
    keys = jax.random.split(key, 2 * S + 1)
    s_inputs = [jax.random.normal(keys[i], (N, 1), jnp.float32) for i in range(S)]
    s_outputs = [
        2.0 * s_inputs[i] + 0.5 * jax.random.normal(keys[S + i], (N, 1), jnp.float32)
        for i in range(S)
    ]
    t_input = 1.3 * jax.random.normal(keys[2 * S], (Nt, 1), jnp.float32) + 0.2

    model = MiniDARNPallas()
    loss, alpha = model.forward(s_inputs, s_outputs, t_input)
    loss = jax.block_until_ready(loss)

    ref_loss = _reference_forward(
        s_inputs, s_outputs, t_input, model.weight, model.bias, model.gamma, model.mu
    )
    assert np.isfinite(np.asarray(loss)), "non-finite loss"
    assert np.allclose(np.asarray(loss), ref_loss, rtol=1e-3, atol=1e-3), (
        f"mismatch: pallas={float(loss)} ref={float(ref_loss)}"
    )
    assert alpha.shape == (S,) and abs(float(alpha.sum()) - 1.0) < 1e-4

    print("KERNEL_OK")
</pallas_src>

<mosaic_0001>
module attributes {stable_mosaic.version = 11 : i64} {
  func.func @_darn_kernel(%arg0: memref<2xf32, #tpu.memory_space<smem>>, %arg1: memref<1x256xf32, #tpu.memory_space<vmem>>, %arg2: memref<3x128xf32, #tpu.memory_space<vmem>>, %arg3: memref<3x128xf32, #tpu.memory_space<vmem>>, %arg4: memref<3x2xf32, #tpu.memory_space<vmem>>) attributes {dimension_semantics = [], scalar_prefetch = 0 : i64, scratch_operands = 0 : i64, tpu.core_type = #tpu.core_type<tc>} {
    %c0 = arith.constant 0 : index
    %0 = memref.load %arg0[%c0] : memref<2xf32, #tpu.memory_space<smem>>
    %c1 = arith.constant 1 : index
    %1 = memref.load %arg0[%c1] : memref<2xf32, #tpu.memory_space<smem>>
    %c0_0 = arith.constant 0 : index
    %c0_1 = arith.constant 0 : index
    %2 = vector.load %arg1[%c0_0, %c0_1] : memref<1x256xf32, #tpu.memory_space<vmem>>, vector<1x256xf32>
    %3 = vector.shape_cast %2 : vector<1x256xf32> to vector<1x1x256xf32>
    %cst = arith.constant dense<0.000000e+00> : vector<1xf32>
    %4 = vector.multi_reduction <add>, %3, %cst [1, 2] : vector<1x1x256xf32> to vector<1xf32>
    %5 = vector.shape_cast %4 : vector<1xf32> to vector<1x1x1xf32>
    %6 = vector.extract %5[0, 0, 0] : f32 from vector<1x1x1xf32>
    %7 = arith.mulf %2, %2 : vector<1x256xf32>
    %8 = vector.shape_cast %7 : vector<1x256xf32> to vector<1x1x256xf32>
    %cst_2 = arith.constant dense<0.000000e+00> : vector<1xf32>
    %9 = vector.multi_reduction <add>, %8, %cst_2 [1, 2] : vector<1x1x256xf32> to vector<1xf32>
    %10 = vector.shape_cast %9 : vector<1xf32> to vector<1x1x1xf32>
    %11 = vector.extract %10[0, 0, 0] : f32 from vector<1x1x1xf32>
    %c0_3 = arith.constant 0 : index
    %c0_4 = arith.constant 0 : index
    %12 = vector.load %arg2[%c0_3, %c0_4] : memref<3x128xf32, #tpu.memory_space<vmem>>, vector<3x128xf32>
    %c0_5 = arith.constant 0 : index
    %c0_6 = arith.constant 0 : index
    %13 = vector.load %arg3[%c0_5, %c0_6] : memref<3x128xf32, #tpu.memory_space<vmem>>, vector<3x128xf32>
    %14 = vector.broadcast %0 : f32 to vector<3x128xf32>
    %15 = arith.mulf %12, %14 : vector<3x128xf32>
    %16 = vector.broadcast %1 : f32 to vector<3x128xf32>
    %17 = arith.addf %15, %16 : vector<3x128xf32>
    %18 = arith.subf %17, %13 : vector<3x128xf32>
    %19 = arith.mulf %18, %18 : vector<3x128xf32>
    %20 = arith.mulf %12, %12 : vector<3x128xf32>
    %21 = tpu.concatenate %19, %12, %20 in 0 : vector<3x128xf32>, vector<3x128xf32>, vector<3x128xf32> -> vector<9x128xf32>
    %cst_7 = arith.constant dense<0.000000e+00> : vector<9xf32>
    %22 = vector.multi_reduction <add>, %21, %cst_7 [1] : vector<9x128xf32> to vector<9xf32>
    %23 = vector.shape_cast %22 : vector<9xf32> to vector<9x1xf32>
    %24 = vector.extract_strided_slice %23 {offsets = [0, 0], sizes = [3, 1], strides = [1, 1]} : vector<9x1xf32> to vector<3x1xf32>
    %25 = vector.extract_strided_slice %23 {offsets = [3, 0], sizes = [3, 1], strides = [1, 1]} : vector<9x1xf32> to vector<3x1xf32>
    %26 = vector.extract_strided_slice %23 {offsets = [6, 0], sizes = [3, 1], strides = [1, 1]} : vector<9x1xf32> to vector<3x1xf32>
    %cst_8 = arith.constant 7.812500e-03 : f32
    %27 = vector.broadcast %cst_8 : f32 to vector<3x1xf32>
    %28 = arith.mulf %24, %27 : vector<3x1xf32>
    %29 = vector.broadcast %11 : f32 to vector<3x1xf32>
    %30 = arith.subf %29, %26 : vector<3x1xf32>
    %31 = vector.broadcast %6 : f32 to vector<3x1xf32>
    %32 = arith.subf %31, %25 : vector<3x1xf32>
    %cst_9 = arith.constant 1.280000e+02 : f32
    %33 = vector.broadcast %cst_9 : f32 to vector<3x1xf32>
    %34 = arith.addf %30, %33 : vector<3x1xf32>
    %cst_10 = arith.constant 5.000000e-01 : f32
    %35 = vector.broadcast %cst_10 : f32 to vector<3x1xf32>
    %36 = arith.mulf %35, %34 : vector<3x1xf32>
    %cst_11 = arith.constant 1.280000e+02 : f32
    %37 = vector.broadcast %cst_11 : f32 to vector<3x1xf32>
    %38 = arith.subf %30, %37 : vector<3x1xf32>
    %cst_12 = arith.constant 2.500000e-01 : f32
    %39 = vector.broadcast %cst_12 : f32 to vector<3x1xf32>
    %40 = arith.mulf %39, %38 : vector<3x1xf32>
    %cst_13 = arith.constant 1.280000e+02 : f32
    %41 = vector.broadcast %cst_13 : f32 to vector<3x1xf32>
    %42 = arith.subf %30, %41 : vector<3x1xf32>
    %43 = arith.mulf %40, %42 : vector<3x1xf32>
    %44 = arith.mulf %32, %32 : vector<3x1xf32>
    %45 = arith.addf %43, %44 : vector<3x1xf32>
    %46 = math.sqrt %45 : vector<3x1xf32>
    %47 = math.absf %36 : vector<3x1xf32>
    %48 = arith.addf %47, %46 : vector<3x1xf32>
    %49 = tpu.concatenate %28, %48 in 1 : vector<3x1xf32>, vector<3x1xf32> -> vector<3x2xf32>
    %c0_14 = arith.constant 0 : index
    %c0_15 = arith.constant 0 : index
    %50 = vector.load %arg4[%c0_14, %c0_15] : memref<3x2xf32, #tpu.memory_space<vmem>>, vector<3x2xf32>
    tpu.vector_store %arg4[%c0_14, %c0_15], %49 {strides = array<i32>} : memref<3x2xf32, #tpu.memory_space<vmem>>, vector<3x2xf32>,
    return
  }
}

</mosaic_0001>

<llo_original>
// kernel: _darn_forward.1
$region0: #{_darn_forward.1}
  #allocation0 [shape = 'u32[]', space=smem, size = 0x4, offset = 0x4, fixed_abs, tag = 'smem constant byte address 0x4 - core index']
  #allocation1 [shape = 'u32[144,128]{1,0:T(1,128)}', space=vmem, size = 0x12000, scoped, tag = 'internal scratch']
  %s0 = inlined_call_operand.vmem [shape: f32[2], index: 0, kind: input, shape index: {}]
  %s1 = inlined_call_operand.vmem [shape: f32[1,256], index: 1, kind: input, shape index: {}]
  %s2 = inlined_call_operand.vmem [shape: f32[3,128], index: 2, kind: input, shape index: {}]
  %s3 = inlined_call_operand.vmem [shape: f32[3,128], index: 3, kind: input, shape index: {}]
  %s4 = inlined_call_operand.vmem [shape: f32[3,2], index: 4, kind: output, shape index: {}]
  %s5 = sld [smem:[#allocation0]]
  $region30: #{_darn_forward.1} parent=0
    _
  %s7 = ssub.s32 1, %s5
  %s8 = scalar_select 0, %s7, %s5
  $region1: #{_darn_forward.1} parent=0
    #allocation2 [shape = 'u8[512]{0}', space=smem, size = 0x200, scoped, tag = 'input window, operand 0, single buffered']
    #allocation3 [shape = 's32[1]{0}', space=sflag, size = 0x4, scoped, tag = 'scoped memory for _darn_forward.1']
    %9 = vsyncpa [#allocation3], 0
    // Predicated region
    $region2: #{_darn_forward.1} parent=1 // pred_check
      _
    $region3: #{_darn_forward.1} parent=1 // pred_check_branch
      %11 = sbr.rel (0) target = $region5
    $region4: #{_darn_forward.1} parent=1 // pred_region
      %s13 = ssub.s32 16, 16
      %14 = vsyncadd [#allocation3], %s13
      %s16 = sshll.u32 %s0, 4
      %s17 = int_to_ptr.vmem [resolvable:$true] %s16
      %19 = dma.vmem_to_smem %s17, 16, [#allocation2], [#allocation3]
    $region5: #{_darn_forward.1} parent=1 // pred_fallthru
      _
    // Predicated region
    $region6: #{_darn_forward.1} parent=1 // pred_check
      _
    $region7: #{_darn_forward.1} parent=1 // pred_check_branch
      %21 = sbr.rel (0) target = $region9
    $region8: #{_darn_forward.1} parent=1 // pred_region
      _
    $region9: #{_darn_forward.1} parent=1 // pred_fallthru
      _
    // Predicated region
    $region10: #{_darn_forward.1} parent=1 // pred_check
      _
    $region11: #{_darn_forward.1} parent=1 // pred_check_branch
      %23 = sbr.rel (0) target = $region13
    $region12: #{_darn_forward.1} parent=1 // pred_region
      _
    $region13: #{_darn_forward.1} parent=1 // pred_fallthru
      _
    // Predicated region
    $region14: #{_darn_forward.1} parent=1 // pred_check
      _
    $region15: #{_darn_forward.1} parent=1 // pred_check_branch
      %25 = sbr.rel (0) target = $region17
    $region16: #{_darn_forward.1} parent=1 // pred_region
      _
    $region17: #{_darn_forward.1} parent=1 // pred_fallthru
      _
    // Predicated region
    $region18: #{_darn_forward.1} parent=1 // pred_check
      _
    $region19: #{_darn_forward.1} parent=1 // pred_check_branch
      %27 = sbr.rel (0) target = $region21
    $region20: #{_darn_forward.1} parent=1 // pred_region
      %28 = dma.done [#allocation3], 16
    $region21: #{_darn_forward.1} parent=1 // pred_fallthru
      _
    %29 = sfence
    %s30 = sld [smem:[#allocation2]]
    %s31 = sld [smem:[#allocation2 + $0x1]]
    %v32 = vld [vmem:[%s1] sm:$0x3]
    %v34 = vlaneseq
    %v35 = vshrl.u32 %v34, 7
    %v36 = vsub.s32 0, %v35
    %v37 = vrot.slane %v32, %v36
    %v38 = vlaneseq
    %v39 = vshrl.u32 %v38, 7
    %v40 = vsub.s32 1, %v39
    %v41 = vrot.slane %v32, %v40
    %vm44 = vcmask 1040384
    %v45 = vsel %vm44, %v37, 0.0
    %v46 = vsel %vm44, %v41, 0.0
    %v47 = vadd.f32 %v45, %v46
    %48 = vadd.xlane.f32.xlu0 %v47
    %v49 = vpop.xlane.xlu0 %48
    %v50 = vrot.slane %v49, 4
    %v51 = vadd.f32 %v49, %v50
    %v52 = vrot.slane %v51, 2
    %v53 = vadd.f32 %v51, %v52
    %v54 = vrot.slane %v53, 1
    %v55 = vadd.f32 %v53, %v54
    %s56 = vtos %v55
    %v57 = vmul.f32 %v32, %v32
    %v59 = vlaneseq
    %v60 = vshrl.u32 %v59, 7
    %v61 = vsub.s32 0, %v60
    %v62 = vrot.slane %v57, %v61
    %v63 = vlaneseq
    %v64 = vshrl.u32 %v63, 7
    %v65 = vsub.s32 1, %v64
    %v66 = vrot.slane %v57, %v65
    %v69 = vsel %vm44, %v62, 0.0
    %v70 = vsel %vm44, %v66, 0.0
    %v71 = vadd.f32 %v69, %v70
    %72 = vadd.xlane.f32.xlu0 %v71
    %v73 = vpop.xlane.xlu0 %72
    %v74 = vrot.slane %v73, 4
    %v75 = vadd.f32 %v73, %v74
    %v76 = vrot.slane %v75, 2
    %v77 = vadd.f32 %v75, %v76
    %v78 = vrot.slane %v77, 1
    %v79 = vadd.f32 %v77, %v78
    %s80 = vtos %v79
    %v81 = vld [vmem:[%s2] sm:$0x7]
    %v82 = vld [vmem:[%s3] sm:$0x7]
    %v83 = vstv %s30
    %v84 = vmul.f32 %v81, %v83
    %v85 = vstv %s31
    %v86 = vadd.f32 %v84, %v85
    %v87 = vsub.f32 %v86, %v82
    %v88 = vmul.f32 %v87, %v87
    %v89 = vmul.f32 %v81, %v81
    %v91 = vrot.slane %v81, 5
    %v94 = vrot.slane %v89, 2
    %vm96 = vcmask 1042432
    %v97 = vsel %vm96, %v88, %v91
    %vm98 = vcmask 1045504
    %v99 = vsel %vm98, %v97, %v94
    %100 = vadd.xlane.f32.xlu0 %v99
    %v101 = vpop.xlane.xlu0 %100
    %v102 = vsel %vm44, %v94, 0.0
    %103 = vadd.xlane.f32.xlu0 %v102
    %v104 = vpop.xlane.xlu0 %103
    %v105 = vmul.f32 %v101, 0.0078125
    %v106 = vstv %s80
    %v107 = vsub.f32 %v106, %v101
    %v108 = vsub.f32 %v106, %v104
    %v109 = vstv %s56
    %v110 = vsub.f32 %v109, %v101
    %v111 = vadd.f32 %v107, 128.0
    %v112 = vadd.f32 %v108, 128.0
    %v113 = vmul.f32 %v111, 0.5
    %v114 = vmul.f32 %v112, 0.5
    %v115 = vsub.f32 %v107, 128.0
    %v116 = vsub.f32 %v108, 128.0
    %v117 = vmul.f32 %v115, 0.25
    %v118 = vmul.f32 %v116, 0.25
    %v119 = vmul.f32 %v117, %v115
    %v120 = vmul.f32 %v118, %v116
    %v121 = vmul.f32 %v110, %v110
    %v123 = vrot.slane %v121, 5
    %v125 = vadd.f32 %v119, %v123
    %v126 = vadd.f32 %v120, %v123
    %v127 = vrsqrt.pop %v125
    %v128 = vmul.f32 %v125, %v127
    %vm129 = vcmp.eq.f32.partialorder %v125, inf
    %v130 = vsel %vm129, %v125, %v128
    %vm131 = vcmp.eq.f32.partialorder %v125, 0.0
    %v132 = vand.u32 %v125, 2147483648
    %v133 = vsel %vm131, %v132, %v130
    %v134 = vrsqrt.pop %v126
    %v135 = vmul.f32 %v126, %v134
    %vm136 = vcmp.eq.f32.partialorder %v126, inf
    %v137 = vsel %vm136, %v126, %v135
    %vm138 = vcmp.eq.f32.partialorder %v126, 0.0
    %v139 = vand.u32 %v126, 2147483648
    %v140 = vsel %vm138, %v139, %v137
    %v141 = vand.u32 2147483647, %v113
    %v142 = vand.u32 2147483647, %v114
    %v143 = vadd.f32 %v141, %v133
    %v144 = vadd.f32 %v142, %v140
    %vm147 = vcmask 1041408
    %v148 = vrot.slane %v143, 6
    %v149 = vrot.slane %v144, 6
    %v150 = vsel %vm147, %v148, %v149
    %151 = vrot.lane.b32.xlu0 %v150, 1
    %v152 = vpop.permute.xlu0 %151
    %vm154 = vcmask 7168
    %v155 = vsel %vm154, %v105, %v152
    %vm156 = vcmask 10240
    %157 = vst.msk [vmem:[%s4] sm:$0x7] %vm156, %v155
    // Predicated region
    $region22: #{_darn_forward.1} parent=1 // pred_check
      _
    $region23: #{_darn_forward.1} parent=1 // pred_check_branch
      %159 = sbr.rel (0) target = $region25
    $region24: #{_darn_forward.1} parent=1 // pred_region
      _
    $region25: #{_darn_forward.1} parent=1 // pred_fallthru
      _
    // Predicated region
    $region26: #{_darn_forward.1} parent=1 // pred_check
      _
    $region27: #{_darn_forward.1} parent=1 // pred_check_branch
      %161 = sbr.rel (0) target = $region29
    $region28: #{_darn_forward.1} parent=1 // pred_region
      _
    $region29: #{_darn_forward.1} parent=1 // pred_fallthru
      _
    %162 = vsyncpa [#allocation3], 1

</llo_original>
